<compile_context>
chip_gen: v5e
topology: v5e:2x2
jax: 0.10.0
libtpu: 0.0.40
codegen_flags: <defaults>
</compile_context>

<pallas_src>
import functools

import jax
import jax.numpy as jnp
from jax.experimental import pallas as pl
from jax.experimental.pallas import tpu as pltpu


def _layernorm_kernel(x_ref, w_ref, b_ref, o_ref, *, eps: float, inv_n: float):
    # x_ref: (TB, C, HWp)   w_ref/b_ref: (1, C, 1)   o_ref: (TB, C, HWp)
    x = x_ref[...].astype(jnp.float32)

    # Fused single-pass statistics (zero padding contributes 0 to both sums;
    # inv_n = 1 / (C * H * W) counts only real elements).
    s = jnp.sum(x, axis=(1, 2), keepdims=True)        # (TB, 1, 1)
    ss = jnp.sum(x * x, axis=(1, 2), keepdims=True)   # (TB, 1, 1)
    mean = s * inv_n
    var = ss * inv_n - mean * mean                    # unbiased=False
    inv = jax.lax.rsqrt(var + eps)                    # EUP

    # Fold affine into a single x*scale + shift apply pass.
    w = w_ref[...].astype(jnp.float32)                # (1, C, 1)
    b = b_ref[...].astype(jnp.float32)                # (1, C, 1)
    scale = inv * w                                   # (TB, C, 1)
    shift = b - mean * scale                          # (TB, C, 1)

    o_ref[...] = (x * scale + shift).astype(o_ref.dtype)


def _choose_batch_tile(B: int, sample_bytes: int,
                       target_bytes: int = 4 << 20) -> int:
    """Largest divisor of B such that the block stays ~<= target_bytes and
    (when B >= 2) the grid keeps at least 2 parallel steps for v7x megacore."""
    max_tb = max(1, target_bytes // max(sample_bytes, 1))
    if B >= 2:
        max_tb = min(max_tb, B // 2)
    max_tb = max(1, min(max_tb, B))
    for tb in range(int(max_tb), 0, -1):
        if B % tb == 0:
            return tb
    return 1


def layer_norm(x: jax.Array, weight: jax.Array, bias: jax.Array,
               eps: float = 1e-5) -> jax.Array:
    """x: (B, C, H, W); weight/bias: (C,). Returns (B, C, H, W)."""
    B, C, H, W = x.shape
    HW = H * W
    HWp = max(128, ((HW + 127) // 128) * 128)  # lane-dense last dim

    x3 = x.reshape(B, C, HW)
    if HWp != HW:
        x3 = jnp.pad(x3, ((0, 0), (0, 0), (0, HWp - HW)))
    w3 = weight.reshape(1, C, 1)
    b3 = bias.reshape(1, C, 1)

    sample_bytes = C * HWp * x3.dtype.itemsize
    TB = _choose_batch_tile(B, sample_bytes)
    grid = (B // TB,)

    inv_n = 1.0 / float(C * HW)  # true element count (excludes lane padding)

    kernel = functools.partial(_layernorm_kernel, eps=float(eps), inv_n=inv_n)

    out3 = pl.pallas_call(
        kernel,
        out_shape=jax.ShapeDtypeStruct((B, C, HWp), x.dtype),
        grid_spec=pltpu.PrefetchScalarGridSpec(
            num_scalar_prefetch=0,
            grid=grid,
            in_specs=[
                pl.BlockSpec((TB, C, HWp), lambda i: (i, 0, 0)),
                pl.BlockSpec((1, C, 1), lambda i: (0, 0, 0)),
                pl.BlockSpec((1, C, 1), lambda i: (0, 0, 0)),
            ],
            out_specs=pl.BlockSpec((TB, C, HWp), lambda i: (i, 0, 0)),
        ),
        compiler_params=pltpu.CompilerParams(
            dimension_semantics=("parallel",),
            vmem_limit_bytes=32 * 1024 * 1024,
        ),
    )(x3, w3, b3)

    return out3[:, :, :HW].reshape(B, C, H, W)


if __name__ == "__main__":
    key = jax.random.PRNGKey(0)
    B, C, H, W = 2, 4, 16, 16

    x = jax.random.normal(key, (B, C, H, W), dtype=jnp.float32)

    # Deterministic params, matching reset_parameters (ones / zeros).
    weight = jnp.ones((C,), dtype=jnp.float32)
    bias = jnp.zeros((C,), dtype=jnp.float32)

    out = layer_norm(x, weight, bias, eps=1e-5)
    out = jax.block_until_ready(out)

    # Pure-JAX reference with the same semantics as the PyTorch forward.
    mean = jnp.mean(x, axis=(1, 2, 3), keepdims=True)
    var = jnp.mean((x - mean) ** 2, axis=(1, 2, 3), keepdims=True)
    ref = (x - mean) / jnp.sqrt(var + 1e-5)
    ref = ref * weight.reshape(1, C, 1, 1) + bias.reshape(1, C, 1, 1)
    assert jnp.allclose(out, ref, atol=1e-4, rtol=1e-4), "mismatch vs reference"

    print("KERNEL_OK")
</pallas_src>

<mosaic_0001>
module attributes {stable_mosaic.version = 11 : i64} {
  func.func @_layernorm_kernel(%arg0: i32, %arg1: memref<1x4x256xf32, #tpu.memory_space<vmem>>, %arg2: memref<1x4x1xf32, #tpu.memory_space<vmem>>, %arg3: memref<1x4x1xf32, #tpu.memory_space<vmem>>, %arg4: memref<1x4x256xf32, #tpu.memory_space<vmem>>) attributes {dimension_semantics = [#tpu.dimension_semantics<parallel>], iteration_bounds = array<i64: 2>, scalar_prefetch = 0 : i64, scratch_operands = 0 : i64, tpu.core_type = #tpu.core_type<tc>, window_params = [{transform_indices = @transform_0, window_bounds = array<i64: 1, 4, 256>}, {pipeline_mode = #tpu.pipeline_mode<synchronous>, transform_indices = @transform_1, window_bounds = array<i64: 1, 4, 1>}, {pipeline_mode = #tpu.pipeline_mode<synchronous>, transform_indices = @transform_2, window_bounds = array<i64: 1, 4, 1>}, {transform_indices = @transform_3, window_bounds = array<i64: 1, 4, 256>}]} {
    %c0 = arith.constant 0 : index
    %c0_0 = arith.constant 0 : index
    %c0_1 = arith.constant 0 : index
    %0 = vector.load %arg1[%c0, %c0_0, %c0_1] : memref<1x4x256xf32, #tpu.memory_space<vmem>>, vector<1x4x256xf32>
    %cst = arith.constant dense<0.000000e+00> : vector<1xf32>
    %1 = vector.multi_reduction <add>, %0, %cst [1, 2] : vector<1x4x256xf32> to vector<1xf32>
    %2 = vector.shape_cast %1 : vector<1xf32> to vector<1x1x1xf32>
    %3 = arith.mulf %0, %0 : vector<1x4x256xf32>
    %cst_2 = arith.constant dense<0.000000e+00> : vector<1xf32>
    %4 = vector.multi_reduction <add>, %3, %cst_2 [1, 2] : vector<1x4x256xf32> to vector<1xf32>
    %5 = vector.shape_cast %4 : vector<1xf32> to vector<1x1x1xf32>
    %cst_3 = arith.constant 9.765625E-4 : f32
    %6 = vector.broadcast %cst_3 : f32 to vector<1x1x1xf32>
    %7 = arith.mulf %2, %6 : vector<1x1x1xf32>
    %cst_4 = arith.constant 9.765625E-4 : f32
    %8 = vector.broadcast %cst_4 : f32 to vector<1x1x1xf32>
    %9 = arith.mulf %5, %8 : vector<1x1x1xf32>
    %10 = arith.mulf %7, %7 : vector<1x1x1xf32>
    %11 = arith.subf %9, %10 : vector<1x1x1xf32>
    %cst_5 = arith.constant 9.99999974E-6 : f32
    %12 = vector.broadcast %cst_5 : f32 to vector<1x1x1xf32>
    %13 = arith.addf %11, %12 : vector<1x1x1xf32>
    %14 = math.rsqrt %13 : vector<1x1x1xf32>
    %c0_6 = arith.constant 0 : index
    %c0_7 = arith.constant 0 : index
    %c0_8 = arith.constant 0 : index
    %15 = vector.load %arg2[%c0_6, %c0_7, %c0_8] : memref<1x4x1xf32, #tpu.memory_space<vmem>>, vector<1x4x1xf32>
    %c0_9 = arith.constant 0 : index
    %c0_10 = arith.constant 0 : index
    %c0_11 = arith.constant 0 : index
    %16 = vector.load %arg3[%c0_9, %c0_10, %c0_11] : memref<1x4x1xf32, #tpu.memory_space<vmem>>, vector<1x4x1xf32>
    %17 = vector.broadcast %14 : vector<1x1x1xf32> to vector<1x4x1xf32>
    %18 = arith.mulf %17, %15 : vector<1x4x1xf32>
    %19 = vector.broadcast %7 : vector<1x1x1xf32> to vector<1x4x1xf32>
    %20 = arith.mulf %19, %18 : vector<1x4x1xf32>
    %21 = arith.subf %16, %20 : vector<1x4x1xf32>
    %22 = vector.broadcast %18 : vector<1x4x1xf32> to vector<1x4x256xf32>
    %23 = arith.mulf %0, %22 : vector<1x4x256xf32>
    %24 = vector.broadcast %21 : vector<1x4x1xf32> to vector<1x4x256xf32>
    %25 = arith.addf %23, %24 : vector<1x4x256xf32>
    %c0_12 = arith.constant 0 : index
    %c0_13 = arith.constant 0 : index
    %c0_14 = arith.constant 0 : index
    %26 = vector.load %arg4[%c0_12, %c0_13, %c0_14] : memref<1x4x256xf32, #tpu.memory_space<vmem>>, vector<1x4x256xf32>
    tpu.vector_store %arg4[%c0_12, %c0_13, %c0_14], %25 {strides = array<i32>} : memref<1x4x256xf32, #tpu.memory_space<vmem>>, vector<1x4x256xf32>,
    return
  }
  func.func @transform_0(%arg0: i32) -> (i32, i32, i32) {
    %c0_i32 = arith.constant 0 : i32
    %c0_i32_0 = arith.constant 0 : i32
    %c0_i32_1 = arith.constant 0 : i32
    return %arg0, %c0_i32, %c0_i32_0 : i32, i32, i32
  }
  func.func @transform_1(%arg0: i32) -> (i32, i32, i32) {
    %c0_i32 = arith.constant 0 : i32
    %c0_i32_0 = arith.constant 0 : i32
    %c0_i32_1 = arith.constant 0 : i32
    %c0_i32_2 = arith.constant 0 : i32
    return %c0_i32, %c0_i32_0, %c0_i32_1 : i32, i32, i32
  }
  func.func @transform_2(%arg0: i32) -> (i32, i32, i32) {
    %c0_i32 = arith.constant 0 : i32
    %c0_i32_0 = arith.constant 0 : i32
    %c0_i32_1 = arith.constant 0 : i32
    %c0_i32_2 = arith.constant 0 : i32
    return %c0_i32, %c0_i32_0, %c0_i32_1 : i32, i32, i32
  }
  func.func @transform_3(%arg0: i32) -> (i32, i32, i32) {
    %c0_i32 = arith.constant 0 : i32
    %c0_i32_0 = arith.constant 0 : i32
    %c0_i32_1 = arith.constant 0 : i32
    return %arg0, %c0_i32, %c0_i32_0 : i32, i32, i32
  }
}

</mosaic_0001>

<llo_original>
// kernel: tpu_custom_call.1
$region0: #{tpu_custom_call.1}
  #allocation0 [shape = 'u32[]', space=smem, size = 0x4, offset = 0x4, fixed_abs, tag = 'smem constant byte address 0x4 - core index']
  #allocation1 [shape = 'u32[72,128]{1,0:T(1,128)}', space=vmem, size = 0x9000, scoped, tag = 'internal scratch']
  %s0 = inlined_call_operand.hbm [shape: f32[2,4,256], index: 0, kind: input, shape index: {}]
  %s1 = inlined_call_operand.vmem [shape: f32[1,4,1], index: 1, kind: input, shape index: {}]
  %s2 = inlined_call_operand.vmem [shape: f32[1,4,1], index: 2, kind: input, shape index: {}]
  %s3 = inlined_call_operand.hbm [shape: f32[2,4,256], index: 3, kind: output, shape index: {}]
  %s4 = sld [smem:[#allocation0]]
  $region49: #{tpu_custom_call.1} parent=0
    _
  %s6 = ssub.s32 1, %s4
  %s7 = scalar_select 0, %s6, %s4
  $region1: #{tpu_custom_call.1} parent=0
    #allocation2 [shape = 'u8[8192]{0}', space=vmem, size = 0x2000, scoped, tag = 'input window, operand 0']
    #allocation3 [shape = 's32[2]{0}', space=sflag, size = 0x8, scoped, tag = 'scoped memory for tpu_custom_call.1']
    #allocation4 [shape = 's32[2]{0}', space=sflag, size = 0x8, scoped, tag = 'scoped memory for tpu_custom_call.1']
    #allocation5 [shape = 'u8[8192]{0}', space=vmem, size = 0x2000, scoped, tag = 'output window, operand 0']
    %8 = vsyncpa [#allocation3], 0
    %s9 = scalar_lea.sflag [#allocation3], 1
    %10 = vsyncpa %s9, 0
    %11 = vsyncpa [#allocation4], 0
    %s12 = scalar_lea.sflag [#allocation4], 1
    %13 = vsyncpa %s12, 0
    loop: start=0, step=1, limit=4
    $region2: #{tpu_custom_call.1} parent=1 // loop_pre_header
      _
    $region3: #{tpu_custom_call.1} parent=1 // loop_header
      %s15 = sphi 0, %s19
      %p16 = scmp.ge.s32.totalorder %s15, 4
      %s25 = sphi 0, %s27
      %s28 = sphi 0, %s25
      %s29 = sphi 0, %s28
      %s45 = sphi 0, %s29
      %s49 = sphi 0, %s49
      %s51 = sphi 0, %s49
      %s52 = sphi 0, %s51
      %s66 = sphi 0, %s52
      %s70 = sphi 0, %s70
      %s72 = sphi 0, %s70
      %s73 = sphi 0, %s72
      %s87 = sphi 0, %s73
      %s93 = sphi 0, %s95
      %s96 = sphi 0, %s93
      %s97 = sphi 0, %s96
      %s113 = sphi 0, %s97
    $region4: #{tpu_custom_call.1} parent=1 // loop_header_branch
      %18 = sbr.rel (%p16) target = $region8
    $region5: #{tpu_custom_call.1} parent=1 // loop_body
      %s20 = ssub.s32 %s15, 1
      %s21 = ssub.s32 %s15, 2
      %s22 = sadd.s32 %s15, 1
      %s23 = ssub.s32 %s15, %s22
      %p24 = scmp.eq.s32.totalorder %s23, 0
      %s26 = sadd.s32 %s25, 1
      %s27 = scalar_select %p24, %s25, %s26
      %p30 = pneg %p24
      %p31 = scmp.eq.s32.totalorder %s15, 1
      %p32 = por %p30, %p31
      %p33 = scmp.ne.s32.totalorder %s25, %s28
      %p34 = scmp.eq.s32.totalorder %s15, 0
      %p35 = por %p33, %p34
      %p36 = scmp.ne.s32.totalorder %s25, %s28
      %p37 = scmp.eq.s32.totalorder %s20, 1
      %p38 = por %p36, %p37
      %p39 = scmp.ne.s32.totalorder %s28, %s29
      %p40 = scmp.eq.s32.totalorder %s20, 0
      %p41 = por %p39, %p40
      %p42 = scmp.ne.s32.totalorder %s28, %s29
      %p43 = scmp.eq.s32.totalorder %s21, 1
      %p44 = por %p42, %p43
      %p46 = scmp.ne.s32.totalorder %s29, %s45
      %p47 = scmp.eq.s32.totalorder %s21, 0
      %p48 = por %p46, %p47
      %s50 = sadd.s32 %s49, 1
      %p53 = scmp.eq.s32.totalorder %s15, 1
      %p54 = scmp.ne.s32.totalorder %s49, %s51
      %p55 = scmp.eq.s32.totalorder %s15, 0
      %p56 = por %p54, %p55
      %p57 = scmp.ne.s32.totalorder %s49, %s51
      %p58 = scmp.eq.s32.totalorder %s20, 1
      %p59 = por %p57, %p58
      %p60 = scmp.ne.s32.totalorder %s51, %s52
      %p61 = scmp.eq.s32.totalorder %s20, 0
      %p62 = por %p60, %p61
      %p63 = scmp.ne.s32.totalorder %s51, %s52
      %p64 = scmp.eq.s32.totalorder %s21, 1
      %p65 = por %p63, %p64
      %p67 = scmp.ne.s32.totalorder %s52, %s66
      %p68 = scmp.eq.s32.totalorder %s21, 0
      %p69 = por %p67, %p68
      %s71 = sadd.s32 %s70, 1
      %p74 = scmp.eq.s32.totalorder %s15, 1
      %p75 = scmp.ne.s32.totalorder %s70, %s72
      %p76 = scmp.eq.s32.totalorder %s15, 0
      %p77 = por %p75, %p76
      %p78 = scmp.ne.s32.totalorder %s70, %s72
      %p79 = scmp.eq.s32.totalorder %s20, 1
      %p80 = por %p78, %p79
      %p81 = scmp.ne.s32.totalorder %s72, %s73
      %p82 = scmp.eq.s32.totalorder %s20, 0
      %p83 = por %p81, %p82
      %p84 = scmp.ne.s32.totalorder %s72, %s73
      %p85 = scmp.eq.s32.totalorder %s21, 1
      %p86 = por %p84, %p85
      %p88 = scmp.ne.s32.totalorder %s73, %s87
      %p89 = scmp.eq.s32.totalorder %s21, 0
      %p90 = por %p88, %p89
      %s91 = ssub.s32 %s15, %s22
      %p92 = scmp.eq.s32.totalorder %s91, 0
      %s94 = sadd.s32 %s93, 1
      %s95 = scalar_select %p92, %s93, %s94
      %p98 = pneg %p92
      %p99 = scmp.eq.s32.totalorder %s15, 1
      %p100 = por %p98, %p99
      %p101 = scmp.ne.s32.totalorder %s93, %s96
      %p102 = scmp.eq.s32.totalorder %s15, 0
      %p103 = por %p101, %p102
      %p104 = scmp.ne.s32.totalorder %s93, %s96
      %p105 = scmp.eq.s32.totalorder %s20, 1
      %p106 = por %p104, %p105
      %p107 = scmp.ne.s32.totalorder %s96, %s97
      %p108 = scmp.eq.s32.totalorder %s20, 0
      %p109 = por %p107, %p108
      %p110 = scmp.ne.s32.totalorder %s96, %s97
      %p111 = scmp.eq.s32.totalorder %s21, 1
      %p112 = por %p110, %p111
      %p114 = scmp.ne.s32.totalorder %s97, %s113
      %p115 = scmp.eq.s32.totalorder %s21, 0
      %p116 = por %p114, %p115
      %p117 = scmp.le.s32.totalorder 1, %s15
      %p118 = scmp.lt.s32.totalorder %s15, 3
      %p119 = pnand %p117, %p118
      %p120 = pneg %p119
      // Predicated region
      $region9: #{tpu_custom_call.1} parent=5 // pred_check
        _
      $region10: #{tpu_custom_call.1} parent=5 // pred_check_branch
        %122 = sbr.rel (%p119) target = $region12
      $region11: #{tpu_custom_call.1} parent=5 // pred_region
        %s123 = ssub.s32 %s15, 1
        // Predicated region
        $region13: #{tpu_custom_call.1} parent=11 // pred_check
          %p124 = pneg %p62
        $region14: #{tpu_custom_call.1} parent=11 // pred_check_branch
          %126 = sbr.rel (%p124) target = $region16
        $region15: #{tpu_custom_call.1} parent=11 // pred_region
          _
        $region16: #{tpu_custom_call.1} parent=11 // pred_fallthru
          _
        // Predicated region
        $region17: #{tpu_custom_call.1} parent=11 // pred_check
          %p127 = pneg %p83
        $region18: #{tpu_custom_call.1} parent=11 // pred_check_branch
          %129 = sbr.rel (%p127) target = $region20
        $region19: #{tpu_custom_call.1} parent=11 // pred_region
          _
        $region20: #{tpu_custom_call.1} parent=11 // pred_fallthru
          _
      $region12: #{tpu_custom_call.1} parent=5 // pred_fallthru
        _
      %p130 = scmp.lt.s32.totalorder %s15, 2
      // Predicated region
      $region21: #{tpu_custom_call.1} parent=5 // pred_check
        %p131 = pneg %p130
      $region22: #{tpu_custom_call.1} parent=5 // pred_check_branch
        %133 = sbr.rel (%p131) target = $region24
      $region23: #{tpu_custom_call.1} parent=5 // pred_region
        // Predicated region
        $region25: #{tpu_custom_call.1} parent=23 // pred_check
          %p134 = pneg %p35
        $region26: #{tpu_custom_call.1} parent=23 // pred_check_branch
          %136 = sbr.rel (%p134) target = $region28
        $region27: #{tpu_custom_call.1} parent=23 // pred_region
          %s137 = sand.u32 %s25, 1
          %s138 = scalar_lea.sflag [#allocation3], %s137
          %s139 = sand.u32 %s25, 1
          %s140 = smul.addr %s139, 8
          %s141 = scalar_lea.vmem [#allocation2], %s140
          %143 = vsyncadd %s138, 0
          %s144 = smul.addr %s15, 2
          %s145 = smul.addr %s144, 4
          %s146 = scalar_lea.hbm %s0, %s145
          %s148 = sshll.u32 %s146, 4
          %s149 = int_to_ptr.hbm [resolvable:$true] %s148
          %s150 = sshll.u32 %s141, 4
          %s151 = int_to_ptr.vmem [resolvable:$true] %s150
          %153 = dma.hbm_to_vmem [thread:$0]  %s149, 128, %s151, %s138
        $region28: #{tpu_custom_call.1} parent=23 // pred_fallthru
          _
      $region24: #{tpu_custom_call.1} parent=5 // pred_fallthru
        _
      %p154 = scmp.le.s32.totalorder 1, %s15
      %p155 = scmp.lt.s32.totalorder %s15, 3
      %p156 = pnand %p154, %p155
      %p157 = pneg %p156
      // Predicated region
      $region29: #{tpu_custom_call.1} parent=5 // pred_check
        _
      $region30: #{tpu_custom_call.1} parent=5 // pred_check_branch
        %159 = sbr.rel (%p156) target = $region32
      $region31: #{tpu_custom_call.1} parent=5 // pred_region
        %s160 = ssub.s32 %s15, 1
        %s161 = sand.u32 %s28, 1
        %s162 = scalar_lea.sflag [#allocation3], %s161
        %s163 = sand.u32 %s28, 1
        %s164 = smul.addr %s163, 8
        %s165 = scalar_lea.vmem [#allocation2], %s164
        // Predicated region
        $region33: #{tpu_custom_call.1} parent=31 // pred_check
          %p166 = pneg %p41
        $region34: #{tpu_custom_call.1} parent=31 // pred_check_branch
          %168 = sbr.rel (%p166) target = $region36
        $region35: #{tpu_custom_call.1} parent=31 // pred_region
          %170 = dma.done %s162, 128
        $region36: #{tpu_custom_call.1} parent=31 // pred_fallthru
          _
        %s171 = sand.u32 %s28, 1
        %s172 = scalar_lea.sflag [#allocation3], %s171
        %s173 = sand.u32 %s28, 1
        %s174 = smul.addr %s173, 8
        %s175 = scalar_lea.vmem [#allocation2], %s174
        %p176 = pneg %p41
        %p177 = pneg %p38
        %p178 = pneg %p62
        %p179 = pneg %p59
        %p180 = pneg %p83
        %p181 = pneg %p80
        %p182 = pneg %p109
        %p183 = pneg %p106
        %s184 = sand.u32 %s96, 1
        %s185 = scalar_lea.sflag [#allocation4], %s184
        %s186 = sand.u32 %s96, 1
        %s187 = smul.addr %s186, 8
        %s188 = scalar_lea.vmem [#allocation5], %s187
        %v189 = vld [vmem:[%s165] sm:$0xff]
        %191 = vst [vmem:[#allocation1] ss:$2 sm:$0xff] %v189
        %v192 = vld.sshfl [vmem:[#allocation1] sm:$0xff pattern:$0x75316420]
        %v193 = vld.sshfl [vmem:[#allocation1 + $0x8] sm:$0xff pattern:$0x75316420]
        %vm196 = vcmask 1043456
        %v197 = vsel %vm196, %v192, 0.0
        %v198 = vsel %vm196, %v193, 0.0
        %v199 = vadd.f32 %v197, %v198
        %200 = vadd.xlane.f32.xlu0 %v199
        %v201 = vpop.xlane.xlu0 %200
        %v202 = vrot.slane %v201, 4
        %v203 = vadd.f32 %v201, %v202
        %v204 = vrot.slane %v203, 2
        %v205 = vadd.f32 %v203, %v204
        %v206 = vrot.slane %v205, 1
        %v207 = vadd.f32 %v205, %v206
        %v208 = vmul.f32 %v189, %v189
        %210 = vst [vmem:[#allocation1] ss:$2 sm:$0xff] %v208
        %v211 = vld.sshfl [vmem:[#allocation1] sm:$0xff pattern:$0x75316420]
        %v212 = vld.sshfl [vmem:[#allocation1 + $0x8] sm:$0xff pattern:$0x75316420]
        %v215 = vsel %vm196, %v211, 0.0
        %v216 = vsel %vm196, %v212, 0.0
        %v217 = vadd.f32 %v215, %v216
        %218 = vadd.xlane.f32.xlu0 %v217
        %v219 = vpop.xlane.xlu0 %218
        %v220 = vrot.slane %v219, 4
        %v221 = vadd.f32 %v219, %v220
        %v222 = vrot.slane %v221, 2
        %v223 = vadd.f32 %v221, %v222
        %v224 = vrot.slane %v223, 1
        %v225 = vadd.f32 %v223, %v224
        %v226 = vmul.f32 %v207, 0.0009765625
        %v227 = vmul.f32 %v225, 0.0009765625
        %v228 = vmul.f32 %v226, %v226
        %v229 = vsub.f32 %v227, %v228
        %v230 = vadd.f32 %v229, 1e-05
        %v231 = vrsqrt.pop %v230
        %v232 = vmul.f32 %v231, %v230
        %v233 = vmul.f32 %v232, %v231
        %v234 = vmul.f32 0.5, %v233
        %v235 = vsub.f32 1.5, %v234
        %v236 = vmul.f32 %v231, %v235
        %vm237 = vweird.f32 %v230
        %vm238 = vweird.f32 %v231
        %vm239 = vmor %vm237, %vm238
        %v240 = vsel %vm239, %v231, %v236
        %v241 = vld [vmem:[%s1] sm:$0xf]
        %v242 = vld [vmem:[%s2] sm:$0xf]
        %v243 = vmul.f32 %v240, %v241
        %v244 = vmul.f32 %v226, %v243
        %v245 = vsub.f32 %v242, %v244
        %247 = vset.pattern.permute.xlu0 0
        %248 = vperm.xlu0 %247, %v243
        %v249 = vpop.permute.xlu0 %248
        %v251 = vunpack.c.l.s4 839922192
        %v252 = vunpack.c.0.s8 %v251
        %v253 = vperm.slane %v249, %v252
        %v255 = vmul.f32 %v189, %v253
        %257 = vset.pattern.permute.xlu0 0
        %258 = vperm.xlu0 %257, %v245
        %v259 = vpop.permute.xlu0 %258
        %v261 = vunpack.c.l.s4 839922192
        %v262 = vunpack.c.0.s8 %v261
        %v263 = vperm.slane %v259, %v262
        %v265 = vadd.f32 %v255, %v263
        %266 = vst [vmem:[%s188] sm:$0xff] %v265
        %s267 = sand.u32 %s96, 1
        %s268 = scalar_lea.sflag [#allocation4], %s267
        %s269 = sand.u32 %s96, 1
        %s270 = smul.addr %s269, 8
        %s271 = scalar_lea.vmem [#allocation5], %s270
        // Predicated region
        $region37: #{tpu_custom_call.1} parent=31 // pred_check
          %p272 = pneg %p106
        $region38: #{tpu_custom_call.1} parent=31 // pred_check_branch
          %274 = sbr.rel (%p272) target = $region40
        $region39: #{tpu_custom_call.1} parent=31 // pred_region
          %276 = vsyncadd %s268, 0
          %s277 = smul.addr %s20, 2
          %s278 = smul.addr %s277, 4
          %s279 = scalar_lea.hbm %s3, %s278
          %s281 = sshll.u32 %s271, 4
          %s282 = int_to_ptr.vmem [resolvable:$true] %s281
          %s283 = sshll.u32 %s279, 4
          %s284 = int_to_ptr.hbm [resolvable:$true] %s283
          %286 = dma.vmem_to_hbm [thread:$0]  %s282, 128, %s284, %s268
        $region40: #{tpu_custom_call.1} parent=31 // pred_fallthru
          _
      $region32: #{tpu_custom_call.1} parent=5 // pred_fallthru
        _
      %p287 = scmp.le.s32.totalorder 2, %s15
      // Predicated region
      $region41: #{tpu_custom_call.1} parent=5 // pred_check
        %p288 = pneg %p287
      $region42: #{tpu_custom_call.1} parent=5 // pred_check_branch
        %290 = sbr.rel (%p288) target = $region44
      $region43: #{tpu_custom_call.1} parent=5 // pred_region
        %s291 = ssub.s32 %s15, 2
        // Predicated region
        $region45: #{tpu_custom_call.1} parent=43 // pred_check
          %p292 = pneg %p112
        $region46: #{tpu_custom_call.1} parent=43 // pred_check_branch
          %294 = sbr.rel (%p292) target = $region48
        $region47: #{tpu_custom_call.1} parent=43 // pred_region
          %s295 = sand.u32 %s97, 1
          %s296 = scalar_lea.sflag [#allocation4], %s295
          %s297 = sand.u32 %s97, 1
          %s298 = smul.addr %s297, 8
          %s299 = scalar_lea.vmem [#allocation5], %s298
          %301 = dma.done %s296, 128
        $region48: #{tpu_custom_call.1} parent=43 // pred_fallthru
          _
      $region44: #{tpu_custom_call.1} parent=5 // pred_fallthru
        _
    $region6: #{tpu_custom_call.1} parent=1 // loop_footer
      %s19 = sadd.s32 1, %s15
    $region7: #{tpu_custom_call.1} parent=1 // loop_footer_branch
      %14 = sbr.rel target = $region3
    $region8: #{tpu_custom_call.1} parent=1 // loop_exit
      _
    %302 = vsyncpa [#allocation3], 1
    %s303 = scalar_lea.sflag [#allocation3], 1
    %304 = vsyncpa %s303, 1
    %305 = vsyncpa [#allocation4], 1
    %s306 = scalar_lea.sflag [#allocation4], 1
    %307 = vsyncpa %s306, 1

</llo_original>
